<compile_context>
chip_gen: v6e
topology: v6e:2x2x1
jax: 0.10.0
libtpu: 0.0.40
codegen_flags: <defaults>
</compile_context>

<pallas_src>
import functools

import jax
import jax.numpy as jnp
from jax.experimental import pallas as pl
from jax.experimental.pallas import tpu as pltpu


def _round_up(n, m):
    return ((n + m - 1) // m) * m


# --------------------------------------------------------------------------- #
# Kernel
# --------------------------------------------------------------------------- #
def actor_critic_kernel(x_ref, w1_ref, b1_ref, wh_ref, bh_ref, out_ref):
    # fc1 + ReLU: MXU matmul with f32 accumulation, f32 epilogue on the VPU.
    h = jnp.dot(x_ref[...], w1_ref[...], preferred_element_type=jnp.float32)
    h = jnp.maximum(h + b1_ref[...], 0.0)                       # (TB, H_pad) f32

    # fused actor+critic head: single (H_pad, 128) matmul, lane-dense output slab.
    y = jnp.dot(h.astype(wh_ref.dtype), wh_ref[...],
                preferred_element_type=jnp.float32)
    out_ref[...] = (y + bh_ref[...]).astype(out_ref.dtype)      # (TB, 128)


# --------------------------------------------------------------------------- #
# Parameter packing (done once, outside the hot loop)
# --------------------------------------------------------------------------- #
OUT_PAD = 128  # 9 actor + 1 critic logits, padded lane-dense


def pack_params(params, *, compute_dtype=jnp.float32):
    """Fuse actor+critic heads and zero-pad to MXU-friendly shapes.

    params = (w1 (D,H), b1 (1,H), wa (H,9), ba (1,9), wc (H,1), bc (1,1))
    Zero columns/rows contribute nothing to the matmuls, so results are exact.
    """
    w1, b1, wa, ba, wc, bc = params
    D_in, H = w1.shape
    H_pad = _round_up(H, 128)

    w1p = jnp.zeros((D_in, H_pad), compute_dtype).at[:, :H].set(w1.astype(compute_dtype))
    b1p = jnp.zeros((1, H_pad), jnp.float32).at[:, :H].set(b1)
    whp = (jnp.zeros((H_pad, OUT_PAD), compute_dtype)
           .at[:H, :9].set(wa.astype(compute_dtype))
           .at[:H, 9:10].set(wc.astype(compute_dtype)))
    bhp = (jnp.zeros((1, OUT_PAD), jnp.float32)
           .at[:, :9].set(ba)
           .at[:, 9:10].set(bc))
    return (w1p, b1p, whp, bhp)


# --------------------------------------------------------------------------- #
# Forward wrapper
# --------------------------------------------------------------------------- #
@functools.partial(jax.jit, static_argnames=("block_batch",))
def _forward_packed(x, packed, *, block_batch=256):
    w1p, b1p, whp, bhp = packed
    B, D_in = x.shape
    H_pad = w1p.shape[1]
    compute_dtype = w1p.dtype

    # --- batch tiling (sublane-aligned) --------------------------------------
    TB = min(block_batch, _round_up(B, 8))
    B_pad = _round_up(B, TB)
    xp = x
    if B_pad != B:
        xp = jnp.zeros((B_pad, D_in), x.dtype).at[:B].set(x)
    xp = xp.astype(compute_dtype)

    grid = (B_pad // TB,)

    cost = pl.CostEstimate(
        flops=2 * B_pad * (D_in * H_pad + H_pad * OUT_PAD),
        transcendentals=0,
        bytes_accessed=(xp.size * xp.dtype.itemsize
                        + w1p.size * w1p.dtype.itemsize
                        + b1p.size * b1p.dtype.itemsize
                        + whp.size * whp.dtype.itemsize
                        + bhp.size * bhp.dtype.itemsize
                        + B_pad * OUT_PAD * 4),
    )

    out = pl.pallas_call(
        actor_critic_kernel,
        out_shape=jax.ShapeDtypeStruct((B_pad, OUT_PAD), jnp.float32),
        grid=grid,
        in_specs=[
            pl.BlockSpec((TB, D_in), lambda i: (i, 0)),        # activations: tiled over batch
            pl.BlockSpec((D_in, H_pad), lambda i: (0, 0)),     # weights: VMEM-resident
            pl.BlockSpec((1, H_pad), lambda i: (0, 0)),
            pl.BlockSpec((H_pad, OUT_PAD), lambda i: (0, 0)),
            pl.BlockSpec((1, OUT_PAD), lambda i: (0, 0)),
        ],
        out_specs=pl.BlockSpec((TB, OUT_PAD), lambda i: (i, 0)),
        compiler_params=pltpu.CompilerParams(dimension_semantics=("parallel",)),
        cost_estimate=cost,
    )(xp, w1p, b1p, whp, bhp)

    actor_out = out[:B, :9]
    critic_out = out[:B, 9:10]
    return actor_out, critic_out


def actor_critic_forward(x, params, *, compute_dtype=jnp.float32, block_batch=256):
    """x: (B, input_size) f32.  params: raw (w1,b1,wa,ba,wc,bc).
    Returns (actor (B, 9), critic (B, 1)) in f32.

    compute_dtype=jnp.bfloat16 halves activation/weight DMA bytes and doubles MXU
    throughput on v6e/v7x; accumulation stays f32.
    For repeated calls (RL step loop), call pack_params() once and use
    _forward_packed(x, packed) directly to skip re-padding every step.
    """
    packed = pack_params(params, compute_dtype=compute_dtype)
    return _forward_packed(x, packed, block_batch=block_batch)


# --------------------------------------------------------------------------- #
# Init + self-test
# --------------------------------------------------------------------------- #
def init_params(key, input_size, hidden_size):
    """Deterministic init mirroring nn.Linear shapes (stored transposed as (in, out))."""
    k1, k2, k3, k4, k5, k6 = jax.random.split(key, 6)

    def lin(kw, kb, fan_in, fan_out):
        bound = 1.0 / jnp.sqrt(fan_in)
        w = jax.random.uniform(kw, (fan_in, fan_out), jnp.float32, -bound, bound)
        b = jax.random.uniform(kb, (1, fan_out), jnp.float32, -bound, bound)
        return w, b

    w1, b1 = lin(k1, k2, input_size, hidden_size)
    wa, ba = lin(k3, k4, hidden_size, 9)
    wc, bc = lin(k5, k6, hidden_size, 1)
    return (w1, b1, wa, ba, wc, bc)


if __name__ == "__main__":
    key = jax.random.PRNGKey(0)
    kx, kp = jax.random.split(key)

    batch = 8
    input_size = 16
    hidden_size = 32

    x = jax.random.normal(kx, (batch, input_size), jnp.float32)
    params = init_params(kp, input_size, hidden_size)

    # pure-JAX reference
    w1, b1, wa, ba, wc, bc = params
    h_ref = jnp.maximum(x @ w1 + b1, 0.0)
    a_ref = h_ref @ wa + ba
    c_ref = h_ref @ wc + bc

    # f32 path (exact vs reference)
    actor_out, critic_out = actor_critic_forward(x, params)
    jax.block_until_ready((actor_out, critic_out))
    assert actor_out.shape == (batch, 9) and critic_out.shape == (batch, 1)
    assert jnp.allclose(actor_out, a_ref, atol=1e-5)
    assert jnp.allclose(critic_out, c_ref, atol=1e-5)

    # bf16 fast path (v6e / v7x): f32 accumulation, bf16 operand precision
    a_bf, c_bf = actor_critic_forward(x, params, compute_dtype=jnp.bfloat16)
    jax.block_until_ready((a_bf, c_bf))
    assert jnp.allclose(a_bf, a_ref, atol=5e-2, rtol=5e-2)
    assert jnp.allclose(c_bf, c_ref, atol=5e-2, rtol=5e-2)

    # non-multiple-of-8 batch exercises the padding path
    x_odd = jax.random.normal(kx, (5, input_size), jnp.float32)
    a_odd, c_odd = actor_critic_forward(x_odd, params)
    jax.block_until_ready((a_odd, c_odd))
    h_odd = jnp.maximum(x_odd @ w1 + b1, 0.0)
    assert jnp.allclose(a_odd, h_odd @ wa + ba, atol=1e-5)
    assert jnp.allclose(c_odd, h_odd @ wc + bc, atol=1e-5)

    # TODO(synk): at batch~8 this net is ~5K FLOPs and launch-overhead dominated;
    # in an RL step loop either batch many env states/timesteps per call or use plain XLA.

    print("KERNEL_OK")
</pallas_src>

<mosaic_0001>
module attributes {stable_mosaic.version = 11 : i64} {
  func.func @actor_critic_kernel(%arg0: i32, %arg1: memref<8x16xf32, #tpu.memory_space<vmem>>, %arg2: memref<16x128xf32, #tpu.memory_space<vmem>>, %arg3: memref<1x128xf32, #tpu.memory_space<vmem>>, %arg4: memref<128x128xf32, #tpu.memory_space<vmem>>, %arg5: memref<1x128xf32, #tpu.memory_space<vmem>>, %arg6: memref<8x128xf32, #tpu.memory_space<vmem>>) attributes {dimension_semantics = [#tpu.dimension_semantics<parallel>], iteration_bounds = array<i64: 1>, scalar_prefetch = 0 : i64, scratch_operands = 0 : i64, tpu.core_type = #tpu.core_type<tc>, window_params = [{transform_indices = @transform_0, window_bounds = array<i64: 8, 16>}, {pipeline_mode = #tpu.pipeline_mode<synchronous>, transform_indices = @transform_1, window_bounds = array<i64: 16, 128>}, {pipeline_mode = #tpu.pipeline_mode<synchronous>, transform_indices = @transform_2, window_bounds = array<i64: 1, 128>}, {pipeline_mode = #tpu.pipeline_mode<synchronous>, transform_indices = @transform_3, window_bounds = array<i64: 128, 128>}, {pipeline_mode = #tpu.pipeline_mode<synchronous>, transform_indices = @transform_4, window_bounds = array<i64: 1, 128>}, {transform_indices = @transform_5, window_bounds = array<i64: 8, 128>}]} {
    %c0 = arith.constant 0 : index
    %c0_0 = arith.constant 0 : index
    %0 = vector.load %arg1[%c0, %c0_0] : memref<8x16xf32, #tpu.memory_space<vmem>>, vector<8x16xf32>
    %c0_1 = arith.constant 0 : index
    %c0_2 = arith.constant 0 : index
    %1 = vector.load %arg2[%c0_1, %c0_2] : memref<16x128xf32, #tpu.memory_space<vmem>>, vector<16x128xf32>
    %cst = arith.constant dense<0.000000e+00> : vector<8x128xf32>
    %2 = tpu.matmul %0, %1, %cst {dimension_numbers = #tpu.dot_dimension_numbers<[1], [0], [0], [1], [0, 0, 1, 1], [], []>} : vector<8x16xf32>, vector<16x128xf32>, vector<8x128xf32> -> vector<8x128xf32>
    %c0_3 = arith.constant 0 : index
    %c0_4 = arith.constant 0 : index
    %3 = vector.load %arg3[%c0_3, %c0_4] : memref<1x128xf32, #tpu.memory_space<vmem>>, vector<1x128xf32>
    %4 = vector.broadcast %3 : vector<1x128xf32> to vector<8x128xf32>
    %5 = arith.addf %2, %4 : vector<8x128xf32>
    %cst_5 = arith.constant 0.000000e+00 : f32
    %6 = vector.broadcast %cst_5 : f32 to vector<8x128xf32>
    %7 = arith.maximumf %5, %6 : vector<8x128xf32>
    %c0_6 = arith.constant 0 : index
    %c0_7 = arith.constant 0 : index
    %8 = vector.load %arg4[%c0_6, %c0_7] : memref<128x128xf32, #tpu.memory_space<vmem>>, vector<128x128xf32>
    %cst_8 = arith.constant dense<0.000000e+00> : vector<8x128xf32>
    %9 = tpu.matmul %7, %8, %cst_8 {dimension_numbers = #tpu.dot_dimension_numbers<[1], [0], [0], [1], [0, 0, 1, 1], [], []>} : vector<8x128xf32>, vector<128x128xf32>, vector<8x128xf32> -> vector<8x128xf32>
    %c0_9 = arith.constant 0 : index
    %c0_10 = arith.constant 0 : index
    %10 = vector.load %arg5[%c0_9, %c0_10] : memref<1x128xf32, #tpu.memory_space<vmem>>, vector<1x128xf32>
    %11 = vector.broadcast %10 : vector<1x128xf32> to vector<8x128xf32>
    %12 = arith.addf %9, %11 : vector<8x128xf32>
    %c0_11 = arith.constant 0 : index
    %c0_12 = arith.constant 0 : index
    %13 = vector.load %arg6[%c0_11, %c0_12] : memref<8x128xf32, #tpu.memory_space<vmem>>, vector<8x128xf32>
    tpu.vector_store %arg6[%c0_11, %c0_12], %12 {strides = array<i32>} : memref<8x128xf32, #tpu.memory_space<vmem>>, vector<8x128xf32>,
    return
  }
  func.func @transform_0(%arg0: i32) -> (i32, i32) {
    %c0_i32 = arith.constant 0 : i32
    %c0_i32_0 = arith.constant 0 : i32
    return %arg0, %c0_i32 : i32, i32
  }
  func.func @transform_1(%arg0: i32) -> (i32, i32) {
    %c0_i32 = arith.constant 0 : i32
    %c0_i32_0 = arith.constant 0 : i32
    %c0_i32_1 = arith.constant 0 : i32
    return %c0_i32, %c0_i32_0 : i32, i32
  }
  func.func @transform_2(%arg0: i32) -> (i32, i32) {
    %c0_i32 = arith.constant 0 : i32
    %c0_i32_0 = arith.constant 0 : i32
    %c0_i32_1 = arith.constant 0 : i32
    return %c0_i32, %c0_i32_0 : i32, i32
  }
  func.func @transform_3(%arg0: i32) -> (i32, i32) {
    %c0_i32 = arith.constant 0 : i32
    %c0_i32_0 = arith.constant 0 : i32
    %c0_i32_1 = arith.constant 0 : i32
    return %c0_i32, %c0_i32_0 : i32, i32
  }
  func.func @transform_4(%arg0: i32) -> (i32, i32) {
    %c0_i32 = arith.constant 0 : i32
    %c0_i32_0 = arith.constant 0 : i32
    %c0_i32_1 = arith.constant 0 : i32
    return %c0_i32, %c0_i32_0 : i32, i32
  }
  func.func @transform_5(%arg0: i32) -> (i32, i32) {
    %c0_i32 = arith.constant 0 : i32
    %c0_i32_0 = arith.constant 0 : i32
    return %arg0, %c0_i32 : i32, i32
  }
}

</mosaic_0001>

<llo_original>
// kernel: _forward_packed.1
$region0: #{_forward_packed.1}
  #allocation0 [shape = 'u32[]', space=smem, size = 0x4, offset = 0x4, fixed_abs, tag = 'smem constant byte address 0x4 - core index']
  #allocation1 [shape = 'u32[144,128]{1,0:T(1,128)}', space=vmem, size = 0x12000, scoped, tag = 'internal scratch']
  %s0 = inlined_call_operand.hbm [shape: f32[8,16], index: 0, kind: input, shape index: {}]
  %s1 = inlined_call_operand.hbm [shape: f32[16,128], index: 1, kind: input, shape index: {}]
  %s2 = inlined_call_operand.vmem [shape: f32[1,128], index: 2, kind: input, shape index: {}]
  %s3 = inlined_call_operand.hbm [shape: f32[128,128], index: 3, kind: input, shape index: {}]
  %s4 = inlined_call_operand.vmem [shape: f32[1,128], index: 4, kind: input, shape index: {}]
  %s5 = inlined_call_operand.vmem [shape: f32[8,128], index: 5, kind: output, shape index: {}]
  %s6 = sld [smem:[#allocation0]]
  $region42: #{_forward_packed.1} parent=0
    _
  %s8 = ssub.s32 1, %s6
  %s9 = scalar_select 0, %s8, %s6
  $region1: #{_forward_packed.1} parent=0
    #allocation2 [shape = 'u8[4096]{0}', space=vmem, size = 0x1000, scoped, tag = 'input window, operand 0, single buffered']
    #allocation3 [shape = 's32[1]{0}', space=sflag, size = 0x4, scoped, tag = 'scoped memory for _forward_packed.1']
    #allocation4 [shape = 'u8[8192]{0}', space=vmem, size = 0x2000, scoped, tag = 'input window, operand 1, single buffered']
    #allocation5 [shape = 's32[1]{0}', space=sflag, size = 0x4, scoped, tag = 'scoped memory for _forward_packed.1']
    #allocation6 [shape = 'u8[65536]{0}', space=vmem, size = 0x10000, scoped, tag = 'input window, operand 3, single buffered']
    %10 = vsyncpa [#allocation3], 0
    %11 = vsyncpa [#allocation5], 0
    // Predicated region
    $region2: #{_forward_packed.1} parent=1 // pred_check
      _
    $region3: #{_forward_packed.1} parent=1 // pred_check_branch
      %13 = sbr.rel (0) target = $region5
    $region4: #{_forward_packed.1} parent=1 // pred_region
      %s15 = ssub.s32 128, 128
      %16 = vsyncadd [#allocation3], %s15
      %s18 = sshll.u32 [#allocation2], 4
      %s19 = int_to_ptr.vmem [resolvable:$true] %s18
      %21 = dma.hbm_to_vmem [thread:$0]  %s0, 128, %s19, [#allocation3]
    $region5: #{_forward_packed.1} parent=1 // pred_fallthru
      _
    // Predicated region
    $region6: #{_forward_packed.1} parent=1 // pred_check
      _
    $region7: #{_forward_packed.1} parent=1 // pred_check_branch
      %23 = sbr.rel (0) target = $region9
    $region8: #{_forward_packed.1} parent=1 // pred_region
      %s25 = ssub.s32 256, 256
      %26 = vsyncadd [#allocation5], %s25
      %s27 = sshll.u32 [#allocation4], 4
      %s28 = int_to_ptr.vmem [resolvable:$true] %s27
      %33 = dma.hbm_to_vmem [thread:$0]  %s1, 256, %s28, [#allocation5], 128, 128, 8
    $region9: #{_forward_packed.1} parent=1 // pred_fallthru
      _
    // Predicated region
    $region10: #{_forward_packed.1} parent=1 // pred_check
      _
    $region11: #{_forward_packed.1} parent=1 // pred_check_branch
      %35 = sbr.rel (0) target = $region13
    $region12: #{_forward_packed.1} parent=1 // pred_region
      _
    $region13: #{_forward_packed.1} parent=1 // pred_fallthru
      _
    // Predicated region
    $region14: #{_forward_packed.1} parent=1 // pred_check
      _
    $region15: #{_forward_packed.1} parent=1 // pred_check_branch
      %37 = sbr.rel (0) target = $region17
    $region16: #{_forward_packed.1} parent=1 // pred_region
      %s39 = ssub.s32 2048, 2048
      %40 = vsyncadd [#allocation5], %s39
      %s41 = sshll.u32 [#allocation6], 4
      %s42 = int_to_ptr.vmem [resolvable:$true] %s41
      %47 = dma.hbm_to_vmem [thread:$0]  %s3, 2048, %s42, [#allocation5], 128, 128, 8
    $region17: #{_forward_packed.1} parent=1 // pred_fallthru
      _
    // Predicated region
    $region18: #{_forward_packed.1} parent=1 // pred_check
      _
    $region19: #{_forward_packed.1} parent=1 // pred_check_branch
      %49 = sbr.rel (0) target = $region21
    $region20: #{_forward_packed.1} parent=1 // pred_region
      _
    $region21: #{_forward_packed.1} parent=1 // pred_fallthru
      _
    // Predicated region
    $region22: #{_forward_packed.1} parent=1 // pred_check
      _
    $region23: #{_forward_packed.1} parent=1 // pred_check_branch
      %51 = sbr.rel (0) target = $region25
    $region24: #{_forward_packed.1} parent=1 // pred_region
      %52 = dma.done [#allocation3], 128
    $region25: #{_forward_packed.1} parent=1 // pred_fallthru
      _
    // Predicated region
    $region26: #{_forward_packed.1} parent=1 // pred_check
      _
    $region27: #{_forward_packed.1} parent=1 // pred_check_branch
      %54 = sbr.rel (0) target = $region29
    $region28: #{_forward_packed.1} parent=1 // pred_region
      %55 = dma.done [#allocation5], 256
    $region29: #{_forward_packed.1} parent=1 // pred_fallthru
      _
    // Predicated region
    $region30: #{_forward_packed.1} parent=1 // pred_check
      _
    $region31: #{_forward_packed.1} parent=1 // pred_check_branch
      %57 = sbr.rel (0) target = $region33
    $region32: #{_forward_packed.1} parent=1 // pred_region
      %58 = dma.done [#allocation5], 2048
    $region33: #{_forward_packed.1} parent=1 // pred_fallthru
      _
    %v59 = vld [vmem:[#allocation2] sm:$0xff]
    %v60 = vld [vmem:[#allocation4] sm:$0xff]
    %v61 = vld [vmem:[#allocation4 + $0x8] sm:$0xff]
    %v62 = vld [vmem:[%s2] sm:$0x1]
    %v64 = vlaneseq
    %v65 = vshrl.u32 %v64, 7
    %v66 = vsub.s32 0, %v65
    %v67 = vrot.slane %v62, %v66
    %vm69 = vcmask 130048
    %v71 = vsel %vm69, %v59, 0
    %73 = vmatprep.subr.mxu0 0.0
    %74 = vmatpush1.msra.mxu0 0.0
    %75 = vmatprep.subr.mxu0 0.0
    %76 = vmatpush1.msra.mxu0 0.0
    %77 = vmatprep.subr.mxu0 0.0
    %78 = vmatpush1.msra.mxu0 0.0
    %79 = vmatprep.subr.mxu0 0.0
    %80 = vmatpush1.msra.mxu0 0.0
    %81 = vmatprep.subr.mxu0 0.0
    %82 = vmatpush1.msra.mxu0 0.0
    %83 = vmatprep.subr.mxu0 0.0
    %84 = vmatpush1.msra.mxu0 0.0
    %85 = vmatprep.subr.mxu0 0.0
    %86 = vmatpush1.msra.mxu0 0.0
    %87 = vmatprep.subr.mxu0 0.0
    %88 = vmatpush1.msra.mxu0 0.0
    %89 = vmatprep.subr.mxu0 0.0
    %90 = vmatpush1.msra.mxu0 0.0
    %91 = vmatprep.subr.mxu0 0.0
    %92 = vmatpush1.msra.mxu0 0.0
    %93 = vmatprep.subr.mxu0 0.0
    %94 = vmatpush1.msra.mxu0 0.0
    %95 = vmatprep.subr.mxu0 0.0
    %96 = vmatpush1.msra.mxu0 0.0
    %97 = vmatprep.subr.mxu0 0.0
    %98 = vmatpush1.msra.mxu0 0.0
    %99 = vmatprep.subr.mxu0 0.0
    %100 = vmatpush1.msra.mxu0 0.0
    %101 = vmatprep.subr.mxu0 0.0
    %102 = vmatpush1.msra.mxu0 %v61
    %103 = vmatprep.subr.mxu0 0.0
    %104 = vmatpush1.msra.mxu0 %v60
    %105 = vmatprep.subr.mxu0 0.0
    %106 = vmatpush2.msra.mxu0 0.0
    %107 = vmatprep.subr.mxu0 0.0
    %108 = vmatpush2.msra.mxu0 0.0
    %109 = vmatprep.subr.mxu0 0.0
    %110 = vmatpush2.msra.mxu0 0.0
    %111 = vmatprep.subr.mxu0 0.0
    %112 = vmatpush2.msra.mxu0 0.0
    %113 = vmatprep.subr.mxu0 0.0
    %114 = vmatpush2.msra.mxu0 0.0
    %115 = vmatprep.subr.mxu0 0.0
    %116 = vmatpush2.msra.mxu0 0.0
    %117 = vmatprep.subr.mxu0 0.0
    %118 = vmatpush2.msra.mxu0 0.0
    %119 = vmatprep.subr.mxu0 0.0
    %120 = vmatpush2.msra.mxu0 0.0
    %121 = vmatprep.subr.mxu0 0.0
    %122 = vmatpush2.msra.mxu0 0.0
    %123 = vmatprep.subr.mxu0 0.0
    %124 = vmatpush2.msra.mxu0 0.0
    %125 = vmatprep.subr.mxu0 0.0
    %126 = vmatpush2.msra.mxu0 0.0
    %127 = vmatprep.subr.mxu0 0.0
    %128 = vmatpush2.msra.mxu0 0.0
    %129 = vmatprep.subr.mxu0 0.0
    %130 = vmatpush2.msra.mxu0 0.0
    %131 = vmatprep.subr.mxu0 0.0
    %132 = vmatpush2.msra.mxu0 0.0
    %133 = vmatprep.subr.mxu0 0.0
    %134 = vmatpush2.msra.mxu0 0.0
    %135 = vmatprep.subr.mxu0 0.0
    %136 = vmatpush2.msra.mxu0 0.0
    %137 = vmatprep.mubr.f32.mxu0 0.0
    %138 = vmatmul.mubr.f32.gmra.mxu0 %v71
    %v139 = vpop.f32.mrf.mxu0
    %v140 = vadd.f32 %v67, %v139
    %v141 = vpop.f32.mrf.mxu0
    %142 = vdwg.mxu0
    %v143 = vmax.f32 %v140, 0.0
    %v144 = vld [vmem:[#allocation6] sm:$0xff]
    %v145 = vld [vmem:[#allocation6 + $0x8] sm:$0xff]
    %v146 = vld [vmem:[#allocation6 + $0x10] sm:$0xff]
    %v147 = vld [vmem:[#allocation6 + $0x18] sm:$0xff]
    %v148 = vld [vmem:[#allocation6 + $0x20] sm:$0xff]
    %v149 = vld [vmem:[#allocation6 + $0x28] sm:$0xff]
    %v150 = vld [vmem:[#allocation6 + $0x30] sm:$0xff]
    %v151 = vld [vmem:[#allocation6 + $0x38] sm:$0xff]
    %v152 = vld [vmem:[#allocation6 + $0x40] sm:$0xff]
    %v153 = vld [vmem:[#allocation6 + $0x48] sm:$0xff]
    %v154 = vld [vmem:[#allocation6 + $0x50] sm:$0xff]
    %v155 = vld [vmem:[#allocation6 + $0x58] sm:$0xff]
    %v156 = vld [vmem:[#allocation6 + $0x60] sm:$0xff]
    %v157 = vld [vmem:[#allocation6 + $0x68] sm:$0xff]
    %v158 = vld [vmem:[#allocation6 + $0x70] sm:$0xff]
    %v159 = vld [vmem:[#allocation6 + $0x78] sm:$0xff]
    %v160 = vld [vmem:[%s4] sm:$0x1]
    %v162 = vlaneseq
    %v163 = vshrl.u32 %v162, 7
    %v164 = vsub.s32 0, %v163
    %v165 = vrot.slane %v160, %v164
    %167 = vmatprep.subr.mxu0 0.0
    %168 = vmatpush1.msra.mxu0 %v159
    %169 = vmatprep.subr.mxu0 0.0
    %170 = vmatpush1.msra.mxu0 %v158
    %171 = vmatprep.subr.mxu0 0.0
    %172 = vmatpush1.msra.mxu0 %v157
    %173 = vmatprep.subr.mxu0 0.0
    %174 = vmatpush1.msra.mxu0 %v156
    %175 = vmatprep.subr.mxu0 0.0
    %176 = vmatpush1.msra.mxu0 %v155
    %177 = vmatprep.subr.mxu0 0.0
    %178 = vmatpush1.msra.mxu0 %v154
    %179 = vmatprep.subr.mxu0 0.0
    %180 = vmatpush1.msra.mxu0 %v153
    %181 = vmatprep.subr.mxu0 0.0
    %182 = vmatpush1.msra.mxu0 %v152
    %183 = vmatprep.subr.mxu0 0.0
    %184 = vmatpush1.msra.mxu0 %v151
    %185 = vmatprep.subr.mxu0 0.0
    %186 = vmatpush1.msra.mxu0 %v150
    %187 = vmatprep.subr.mxu0 0.0
    %188 = vmatpush1.msra.mxu0 %v149
    %189 = vmatprep.subr.mxu0 0.0
    %190 = vmatpush1.msra.mxu0 %v148
    %191 = vmatprep.subr.mxu0 0.0
    %192 = vmatpush1.msra.mxu0 %v147
    %193 = vmatprep.subr.mxu0 0.0
    %194 = vmatpush1.msra.mxu0 %v146
    %195 = vmatprep.subr.mxu0 0.0
    %196 = vmatpush1.msra.mxu0 %v145
    %197 = vmatprep.subr.mxu0 0.0
    %198 = vmatpush1.msra.mxu0 %v144
    %199 = vmatprep.subr.mxu0 0.0
    %200 = vmatpush2.msra.mxu0 0.0
    %201 = vmatprep.subr.mxu0 0.0
    %202 = vmatpush2.msra.mxu0 0.0
    %203 = vmatprep.subr.mxu0 0.0
    %204 = vmatpush2.msra.mxu0 0.0
    %205 = vmatprep.subr.mxu0 0.0
    %206 = vmatpush2.msra.mxu0 0.0
    %207 = vmatprep.subr.mxu0 0.0
    %208 = vmatpush2.msra.mxu0 0.0
    %209 = vmatprep.subr.mxu0 0.0
    %210 = vmatpush2.msra.mxu0 0.0
    %211 = vmatprep.subr.mxu0 0.0
    %212 = vmatpush2.msra.mxu0 0.0
    %213 = vmatprep.subr.mxu0 0.0
    %214 = vmatpush2.msra.mxu0 0.0
    %215 = vmatprep.subr.mxu0 0.0
    %216 = vmatpush2.msra.mxu0 0.0
    %217 = vmatprep.subr.mxu0 0.0
    %218 = vmatpush2.msra.mxu0 0.0
    %219 = vmatprep.subr.mxu0 0.0
    %220 = vmatpush2.msra.mxu0 0.0
    %221 = vmatprep.subr.mxu0 0.0
    %222 = vmatpush2.msra.mxu0 0.0
    %223 = vmatprep.subr.mxu0 0.0
    %224 = vmatpush2.msra.mxu0 0.0
    %225 = vmatprep.subr.mxu0 0.0
    %226 = vmatpush2.msra.mxu0 0.0
    %227 = vmatprep.subr.mxu0 0.0
    %228 = vmatpush2.msra.mxu0 0.0
    %229 = vmatprep.subr.mxu0 0.0
    %230 = vmatpush2.msra.mxu0 0.0
    %231 = vmatprep.mubr.f32.mxu0 0.0
    %232 = vmatmul.mubr.f32.gmra.mxu0 %v143
    %v233 = vpop.f32.mrf.mxu0
    %v234 = vadd.f32 %v165, %v233
    %v235 = vpop.f32.mrf.mxu0
    %236 = vdwg.mxu0
    %237 = vst [vmem:[%s5] sm:$0xff] %v234
    // Predicated region
    $region34: #{_forward_packed.1} parent=1 // pred_check
      _
    $region35: #{_forward_packed.1} parent=1 // pred_check_branch
      %239 = sbr.rel (0) target = $region37
    $region36: #{_forward_packed.1} parent=1 // pred_region
      _
    $region37: #{_forward_packed.1} parent=1 // pred_fallthru
      _
    // Predicated region
    $region38: #{_forward_packed.1} parent=1 // pred_check
      _
    $region39: #{_forward_packed.1} parent=1 // pred_check_branch
      %241 = sbr.rel (0) target = $region41
    $region40: #{_forward_packed.1} parent=1 // pred_region
      _
    $region41: #{_forward_packed.1} parent=1 // pred_fallthru
      _
    %242 = vsyncpa [#allocation3], 1
    %243 = vsyncpa [#allocation5], 1

</llo_original>
